<compile_context>
chip_gen: v7x
topology: tpu7x:2x2x1
jax: 0.10.0
libtpu: 0.0.40
codegen_flags: <defaults>
</compile_context>

<pallas_src>
import functools

import jax
import jax.numpy as jnp
from jax.experimental import pallas as pl
from jax.experimental.pallas import tpu as pltpu


def _round_up(x, m):
    return ((x + m - 1) // m) * m


def _pick_tile_hw(hw, c, itemsize, *, target_lanes=2048, budget_bytes=16 << 20):
    """Largest multiple-of-128 HW tile <= target_lanes whose double-buffered
    encoded tile stays comfortably inside scoped VMEM."""
    thw = min(target_lanes, _round_up(hw, 128))
    while thw > 128 and 2 * c * thw * itemsize > budget_bytes:
        thw //= 2
    return _round_up(thw, 128)


def _vectors_from_mask_kernel(labels_ref, enc_ref, mask_ref, out_ref, acc_ref,
                              *, hw, thw, n_labels):
    # labels_ref: SMEM (V,) int32 (scalar prefetch)
    # enc_ref:    VMEM (1, C, THW) float      (streamed HW tile)
    # mask_ref:   VMEM (1, 1, THW) int16      (streamed HW tile)
    # out_ref:    VMEM (1, C, V)   float      (resident across the HW axis)
    # acc_ref:    VMEM (C, V)      float32    (running-max accumulator)
    k = pl.program_id(1)

    @pl.when(k == 0)
    def _init():
        acc_ref[...] = jnp.full(acc_ref.shape, -jnp.inf, dtype=acc_ref.dtype)

    enc = enc_ref[0]                        # (C, THW), stays in input dtype
    msk = mask_ref[0].astype(jnp.int32)     # (1, THW), one upcast per tile

    if hw % thw != 0:
        # Boundary tile: zero out out-of-range mask lanes once per tile
        # (labels are nonzero, so 0 never matches).
        col = jax.lax.broadcasted_iota(jnp.int32, msk.shape, 1) + k * thw
        msk = jnp.where(col < hw, msk, 0)

    # Per-label masked max over this HW tile; fold the whole (C, V) block into
    # the accumulator with ONE vectorized read-modify-write (no per-row
    # sublane-1 stores).
    cols = []
    for v in range(n_labels):               # V is small & static -> unrolled
        sel = msk == labels_ref[v]                          # (1, THW)
        masked = jnp.where(sel, enc, -jnp.inf)              # scalar fill
        cols.append(jnp.max(masked, axis=-1, keepdims=True))  # (C, 1)
    tile_max = jnp.concatenate(cols, axis=-1)               # (C, V)
    acc_ref[...] = jnp.maximum(acc_ref[...], tile_max)

    @pl.when(k == pl.num_programs(1) - 1)
    def _finalize():
        out_ref[0] = acc_ref[...].astype(out_ref.dtype)     # single bulk store


def vectors_from_mask_v2(encoded, masks, labels, *, tile_hw=None):
    """encoded: (B, C, H, W) float, masks: (B, 1, H, W) int,
    labels: (V,) sorted nonzero mask values (same for every batch).
    Returns (B, C, V, 1) like the PyTorch module."""
    B, C, H, W = encoded.shape
    HW = H * W
    V = int(labels.shape[0])

    enc = encoded.reshape(B, C, HW)
    # int16 mask stream: mask traffic is a big slice of HBM bytes when C is
    # small; label values are assumed to fit in int16.
    msk = masks.reshape(B, 1, HW).astype(jnp.int16)
    labels = labels.astype(jnp.int32)       # SMEM scalars are 32-bit

    itemsize = jnp.dtype(encoded.dtype).itemsize
    thw = tile_hw if tile_hw is not None else _pick_tile_hw(HW, C, itemsize)
    nk = pl.cdiv(HW, thw)

    # 2 buffers x (enc tile + mask tile + out block) + accumulator, with
    # headroom; floor 32 MiB, cap 48 MiB (safe on v7x's 64 MiB physical VMEM).
    needed = 2 * (C * thw * itemsize + thw * 2 + C * V * itemsize) + C * V * 4
    vmem_limit = int(min(max(2 * needed, 32 << 20), 48 << 20))

    kernel = functools.partial(_vectors_from_mask_kernel,
                               hw=HW, thw=thw, n_labels=V)

    out = pl.pallas_call(
        kernel,
        out_shape=jax.ShapeDtypeStruct((B, C, V), encoded.dtype),
        grid_spec=pltpu.PrefetchScalarGridSpec(
            num_scalar_prefetch=1,
            grid=(B, nk),                   # reduction (HW tiles) axis last
            in_specs=[
                pl.BlockSpec((1, C, thw), lambda b, k, lbl: (b, 0, k)),
                pl.BlockSpec((1, 1, thw), lambda b, k, lbl: (b, 0, k)),
            ],
            out_specs=pl.BlockSpec((1, C, V), lambda b, k, lbl: (b, 0, 0)),
            scratch_shapes=[pltpu.VMEM((C, V), jnp.float32)],
        ),
        compiler_params=pltpu.CompilerParams(
            dimension_semantics=("parallel", "arbitrary"),
            vmem_limit_bytes=vmem_limit,
        ),
    )(labels, enc, msk)

    # (B, C, V) -> unsqueeze(3) -> (B, C, V, 1)  (== transpose(1,2).unsqueeze(3))
    return out[..., None]


def _reference(encoded, masks, labels):
    B, C, H, W = encoded.shape
    enc = encoded.reshape(B, C, H * W)
    msk = masks.reshape(B, 1, H * W).astype(jnp.int32)
    outs = []
    for v in list(labels):
        sel = (msk == v)                                   # (B, 1, HW)
        masked = jnp.where(sel, enc, -jnp.inf)             # (B, C, HW)
        outs.append(jnp.max(masked, axis=-1))              # (B, C)
    out = jnp.stack(outs, axis=1)                          # (B, V, C)
    return jnp.transpose(out, (0, 2, 1))[..., None]        # (B, C, V, 1)


if __name__ == "__main__":
    B, C, H, W = 2, 4, 16, 16
    V = 3

    key = jax.random.PRNGKey(0)
    encoded = jax.random.normal(key, (B, C, H, W), dtype=jnp.float32)

    # Deterministic mask: vertical stripes with values 0..3 so every batch
    # contains the same nonzero labels {1, 2, 3} (plus background 0).
    col = jnp.arange(W)[None, None, None, :]
    masks = jnp.broadcast_to((col // (W // 4)) % 4, (B, 1, H, W)).astype(jnp.int32)
    labels = jnp.arange(1, V + 1, dtype=jnp.int32)  # sorted nonzero labels

    # tile_hw=128 -> 2 HW tiles, exercising the streamed-reduction/accumulator
    # path even at this toy size (default tile picker would use one tile).
    out = vectors_from_mask_v2(encoded, masks, labels, tile_hw=128)
    out = jax.block_until_ready(out)

    ref = _reference(encoded, masks, labels)
    assert out.shape == (B, C, V, 1), out.shape
    assert jnp.allclose(out, ref, atol=1e-6), "mismatch vs reference"

    print("KERNEL_OK")
</pallas_src>

<mosaic_0001>
module attributes {stable_mosaic.version = 11 : i64} {
  func.func @_vectors_from_mask_kernel(%arg0: i32, %arg1: i32, %arg2: memref<3xi32, #tpu.memory_space<smem>>, %arg3: memref<1x4x128xf32, #tpu.memory_space<vmem>>, %arg4: memref<1x1x128xi16, #tpu.memory_space<vmem>>, %arg5: memref<1x4x3xf32, #tpu.memory_space<vmem>>, %arg6: memref<4x3xf32, #tpu.memory_space<vmem>>) attributes {dimension_semantics = [#tpu.dimension_semantics<parallel>, #tpu.dimension_semantics<arbitrary>], iteration_bounds = array<i64: 2, 2>, scalar_prefetch = 1 : i64, scratch_operands = 1 : i64, tpu.core_type = #tpu.core_type<tc>, window_params = [{transform_indices = @transform_0, window_bounds = array<i64: 1, 4, 128>}, {transform_indices = @transform_1, window_bounds = array<i64: 1, 1, 128>}, {transform_indices = @transform_2, window_bounds = array<i64: 1, 4, 3>}]} {
    %c0_i32 = arith.constant 0 : i32
    %0 = arith.cmpi eq, %arg1, %c0_i32 : i32
    %1 = arith.extui %0 : i1 to i32
    %c0_i32_0 = arith.constant 0 : i32
    %2 = arith.cmpi ne, %1, %c0_i32_0 : i32
    scf.if %2 {
      %cst_17 = arith.constant 0xFF800000 : f32
      %42 = vector.broadcast %cst_17 : f32 to vector<4x3xf32>
      %c0_18 = arith.constant 0 : index
      %c0_19 = arith.constant 0 : index
      %43 = vector.load %arg6[%c0_18, %c0_19] : memref<4x3xf32, #tpu.memory_space<vmem>>, vector<4x3xf32>
      tpu.vector_store %arg6[%c0_18, %c0_19], %42 {strides = array<i32>} : memref<4x3xf32, #tpu.memory_space<vmem>>, vector<4x3xf32>,
    } else {
    }
    %c0 = arith.constant 0 : index
    %c0_1 = arith.constant 0 : index
    %c0_2 = arith.constant 0 : index
    %3 = vector.load %arg3[%c0, %c0_1, %c0_2] : memref<1x4x128xf32, #tpu.memory_space<vmem>>, vector<1x4x128xf32>
    %4 = vector.shape_cast %3 : vector<1x4x128xf32> to vector<4x128xf32>
    %c0_3 = arith.constant 0 : index
    %c0_4 = arith.constant 0 : index
    %c0_5 = arith.constant 0 : index
    %5 = vector.load %arg4[%c0_3, %c0_4, %c0_5] : memref<1x1x128xi16, #tpu.memory_space<vmem>>, vector<1x1x128xi16>
    %6 = vector.shape_cast %5 : vector<1x1x128xi16> to vector<1x128xi16>
    %7 = arith.extsi %6 : vector<1x128xi16> to vector<1x128xi32>
    %c0_6 = arith.constant 0 : index
    %8 = memref.load %arg2[%c0_6] : memref<3xi32, #tpu.memory_space<smem>>
    %9 = vector.broadcast %8 : i32 to vector<1x128xi32>
    %10 = arith.cmpi eq, %7, %9 : vector<1x128xi32>
    %cst = arith.constant 0xFF800000 : f32
    %11 = vector.shape_cast %10 : vector<1x128xi1> to vector<1x128xi1>
    %12 = vector.broadcast %11 : vector<1x128xi1> to vector<4x128xi1>
    %13 = vector.broadcast %cst : f32 to vector<4x128xf32>
    %14 = arith.select %12, %4, %13 : vector<4x128xi1>, vector<4x128xf32>
    %cst_7 = arith.constant dense<0xFF800000> : vector<4xf32>
    %15 = vector.multi_reduction <maximumf>, %14, %cst_7 [1] : vector<4x128xf32> to vector<4xf32>
    %16 = vector.shape_cast %15 : vector<4xf32> to vector<4x1xf32>
    %c1 = arith.constant 1 : index
    %17 = memref.load %arg2[%c1] : memref<3xi32, #tpu.memory_space<smem>>
    %18 = vector.broadcast %17 : i32 to vector<1x128xi32>
    %19 = arith.cmpi eq, %7, %18 : vector<1x128xi32>
    %cst_8 = arith.constant 0xFF800000 : f32
    %20 = vector.shape_cast %19 : vector<1x128xi1> to vector<1x128xi1>
    %21 = vector.broadcast %20 : vector<1x128xi1> to vector<4x128xi1>
    %22 = vector.broadcast %cst_8 : f32 to vector<4x128xf32>
    %23 = arith.select %21, %4, %22 : vector<4x128xi1>, vector<4x128xf32>
    %cst_9 = arith.constant dense<0xFF800000> : vector<4xf32>
    %24 = vector.multi_reduction <maximumf>, %23, %cst_9 [1] : vector<4x128xf32> to vector<4xf32>
    %25 = vector.shape_cast %24 : vector<4xf32> to vector<4x1xf32>
    %c2 = arith.constant 2 : index
    %26 = memref.load %arg2[%c2] : memref<3xi32, #tpu.memory_space<smem>>
    %27 = vector.broadcast %26 : i32 to vector<1x128xi32>
    %28 = arith.cmpi eq, %7, %27 : vector<1x128xi32>
    %cst_10 = arith.constant 0xFF800000 : f32
    %29 = vector.shape_cast %28 : vector<1x128xi1> to vector<1x128xi1>
    %30 = vector.broadcast %29 : vector<1x128xi1> to vector<4x128xi1>
    %31 = vector.broadcast %cst_10 : f32 to vector<4x128xf32>
    %32 = arith.select %30, %4, %31 : vector<4x128xi1>, vector<4x128xf32>
    %cst_11 = arith.constant dense<0xFF800000> : vector<4xf32>
    %33 = vector.multi_reduction <maximumf>, %32, %cst_11 [1] : vector<4x128xf32> to vector<4xf32>
    %34 = vector.shape_cast %33 : vector<4xf32> to vector<4x1xf32>
    %35 = tpu.concatenate %16, %25, %34 in 1 : vector<4x1xf32>, vector<4x1xf32>, vector<4x1xf32> -> vector<4x3xf32>
    %c0_12 = arith.constant 0 : index
    %c0_13 = arith.constant 0 : index
    %36 = vector.load %arg6[%c0_12, %c0_13] : memref<4x3xf32, #tpu.memory_space<vmem>>, vector<4x3xf32>
    %37 = arith.maximumf %36, %35 : vector<4x3xf32>
    %c0_14 = arith.constant 0 : index
    %c0_15 = arith.constant 0 : index
    %38 = vector.load %arg6[%c0_14, %c0_15] : memref<4x3xf32, #tpu.memory_space<vmem>>, vector<4x3xf32>
    tpu.vector_store %arg6[%c0_14, %c0_15], %37 {strides = array<i32>} : memref<4x3xf32, #tpu.memory_space<vmem>>, vector<4x3xf32>,
    %c1_i32 = arith.constant 1 : i32
    %39 = arith.cmpi eq, %arg1, %c1_i32 : i32
    %40 = arith.extui %39 : i1 to i32
    %c0_i32_16 = arith.constant 0 : i32
    %41 = arith.cmpi ne, %40, %c0_i32_16 : i32
    scf.if %41 {
      %c0_17 = arith.constant 0 : index
      %c0_18 = arith.constant 0 : index
      %42 = vector.load %arg6[%c0_17, %c0_18] : memref<4x3xf32, #tpu.memory_space<vmem>>, vector<4x3xf32>
      %c0_19 = arith.constant 0 : index
      %c0_20 = arith.constant 0 : index
      %c0_21 = arith.constant 0 : index
      %43 = vector.load %arg5[%c0_19, %c0_20, %c0_21] : memref<1x4x3xf32, #tpu.memory_space<vmem>>, vector<1x4x3xf32>
      %44 = vector.shape_cast %43 : vector<1x4x3xf32> to vector<4x3xf32>
      %45 = vector.shape_cast %42 : vector<4x3xf32> to vector<1x4x3xf32>
      tpu.vector_store %arg5[%c0_19, %c0_20, %c0_21], %45 {strides = array<i32>} : memref<1x4x3xf32, #tpu.memory_space<vmem>>, vector<1x4x3xf32>,
    } else {
    }
    return
  }
  func.func @transform_0(%arg0: i32, %arg1: i32, %arg2: memref<3xi32, #tpu.memory_space<smem>>) -> (i32, i32, i32) {
    %c0_i32 = arith.constant 0 : i32
    %c0_i32_0 = arith.constant 0 : i32
    return %arg0, %c0_i32, %arg1 : i32, i32, i32
  }
  func.func @transform_1(%arg0: i32, %arg1: i32, %arg2: memref<3xi32, #tpu.memory_space<smem>>) -> (i32, i32, i32) {
    %c0_i32 = arith.constant 0 : i32
    %c0_i32_0 = arith.constant 0 : i32
    return %arg0, %c0_i32, %arg1 : i32, i32, i32
  }
  func.func @transform_2(%arg0: i32, %arg1: i32, %arg2: memref<3xi32, #tpu.memory_space<smem>>) -> (i32, i32, i32) {
    %c0_i32 = arith.constant 0 : i32
    %c0_i32_0 = arith.constant 0 : i32
    %c0_i32_1 = arith.constant 0 : i32
    return %arg0, %c0_i32, %c0_i32_0 : i32, i32, i32
  }
}

</mosaic_0001>

<llo_original>
// kernel: tpu_custom_call.1
$region0: #{tpu_custom_call.1}
  #allocation0 [shape = 'u32[]', space=smem, size = 0x4, offset = 0x4, fixed_abs, tag = 'smem constant byte address 0x4 - core index']
  #allocation1 [shape = 'u32[144,128]{1,0:T(1,128)}', space=vmem, size = 0x12000, scoped, tag = 'internal scratch']
  #allocation2 [shape = 'f32[4,3]{1,0:T(4,128)}', space=vmem, size = 0x800, scoped, tag = 'scratch operand']
  #allocation3 [shape = 's32[1]{0}', space=sflag, size = 0x4, scoped, tag = 'scoped memory for tpu_custom_call.1']
  #allocation4 [shape = 'u8[512]{0}', space=smem, size = 0x200, scoped, tag = 'prefetched SMEM operand 0']
  %s0 = inlined_call_operand.vmem [shape: s32[3], index: 0, kind: input, shape index: {}]
  %s1 = inlined_call_operand.hbm [shape: f32[2,4,256], index: 1, kind: input, shape index: {}]
  %s2 = inlined_call_operand.vmem [shape: s16[2,1,256], index: 2, kind: input, shape index: {}]
  %s3 = inlined_call_operand.vmem [shape: f32[2,4,3], index: 3, kind: output, shape index: {}]
  %s4 = sld [smem:[#allocation0]]
  $region53: #{tpu_custom_call.1} parent=0
    _
  %s6 = ssub.s32 1, %s4
  %s7 = scalar_select 0, %s6, %s4
  %s8 = sshll.u32 %s0, 4
  %s9 = int_to_ptr.vmem [resolvable:$true] %s8
  %11 = dma.vmem_to_smem %s9, 16, [#allocation4], [#allocation3]
  %12 = dma.done [#allocation3], 16
  %13 = sfence
  $region1: #{tpu_custom_call.1} parent=0
    #allocation5 [shape = 'u8[4096]{0}', space=vmem, size = 0x1000, scoped, tag = 'input window, operand 1']
    #allocation6 [shape = 's32[2]{0}', space=sflag, size = 0x8, scoped, tag = 'scoped memory for tpu_custom_call.1']
    %14 = vsyncpa [#allocation6], 0
    %s15 = scalar_lea.sflag [#allocation6], 1
    %16 = vsyncpa %s15, 0
    loop: start=0, step=1, limit=6
    $region2: #{tpu_custom_call.1} parent=1 // loop_pre_header
      _
    $region3: #{tpu_custom_call.1} parent=1 // loop_header
      %s18 = sphi 0, %s22
      %p19 = scmp.ge.s32.totalorder %s18, 6
      %s25 = sphi 0, %s37
      %s26 = sphi 0, %s33
      %s27 = sphi 0, %s25
      %s28 = sphi 0, %s26
      %s29 = sphi 0, %s27
      %s30 = sphi 0, %s28
      %s42 = sphi 0, %s44
      %s45 = sphi 0, %s42
      %s46 = sphi 0, %s45
      %s62 = sphi 0, %s46
      %s70 = sphi 0, %s72
      %s73 = sphi 0, %s70
      %s74 = sphi 0, %s73
      %s90 = sphi 0, %s74
      %s96 = sphi 0, %s98
      %s99 = sphi 0, %s96
      %s100 = sphi 0, %s99
      %s116 = sphi 0, %s100
    $region4: #{tpu_custom_call.1} parent=1 // loop_header_branch
      %21 = sbr.rel (%p19) target = $region8
    $region5: #{tpu_custom_call.1} parent=1 // loop_body
      %s23 = ssub.s32 %s18, 1
      %s24 = ssub.s32 %s18, 2
      %s31 = sadd.s32 1, %s26
      %p32 = scmp.ge.s32.totalorder %s31, 2
      %s33 = scalar_select %p32, 0, %s31
      %s34 = sadd.s32 1, %s25
      %s35 = scalar_select %p32, %s34, %s25
      %p36 = scmp.ge.s32.totalorder %s35, 2
      %s37 = scalar_select %p36, 0, %s35
      %s38 = ssub.s32 %s25, %s37
      %s39 = ssub.s32 %s26, %s33
      %s40 = sor.u32 %s38, %s39
      %p41 = scmp.eq.s32.totalorder %s40, 0
      %s43 = sadd.s32 %s42, 1
      %s44 = scalar_select %p41, %s42, %s43
      %p47 = pneg %p41
      %p48 = scmp.eq.s32.totalorder %s18, 3
      %p49 = por %p47, %p48
      %p50 = scmp.ne.s32.totalorder %s42, %s45
      %p51 = scmp.eq.s32.totalorder %s18, 0
      %p52 = por %p50, %p51
      %p53 = scmp.ne.s32.totalorder %s42, %s45
      %p54 = scmp.eq.s32.totalorder %s23, 3
      %p55 = por %p53, %p54
      %p56 = scmp.ne.s32.totalorder %s45, %s46
      %p57 = scmp.eq.s32.totalorder %s23, 0
      %p58 = por %p56, %p57
      %p59 = scmp.ne.s32.totalorder %s45, %s46
      %p60 = scmp.eq.s32.totalorder %s24, 3
      %p61 = por %p59, %p60
      %p63 = scmp.ne.s32.totalorder %s46, %s62
      %p64 = scmp.eq.s32.totalorder %s24, 0
      %p65 = por %p63, %p64
      %s66 = ssub.s32 %s25, %s37
      %s67 = ssub.s32 %s26, %s33
      %s68 = sor.u32 %s66, %s67
      %p69 = scmp.eq.s32.totalorder %s68, 0
      %s71 = sadd.s32 %s70, 1
      %s72 = scalar_select %p69, %s70, %s71
      %p75 = pneg %p69
      %p76 = scmp.eq.s32.totalorder %s18, 3
      %p77 = por %p75, %p76
      %p78 = scmp.ne.s32.totalorder %s70, %s73
      %p79 = scmp.eq.s32.totalorder %s18, 0
      %p80 = por %p78, %p79
      %p81 = scmp.ne.s32.totalorder %s70, %s73
      %p82 = scmp.eq.s32.totalorder %s23, 3
      %p83 = por %p81, %p82
      %p84 = scmp.ne.s32.totalorder %s73, %s74
      %p85 = scmp.eq.s32.totalorder %s23, 0
      %p86 = por %p84, %p85
      %p87 = scmp.ne.s32.totalorder %s73, %s74
      %p88 = scmp.eq.s32.totalorder %s24, 3
      %p89 = por %p87, %p88
      %p91 = scmp.ne.s32.totalorder %s74, %s90
      %p92 = scmp.eq.s32.totalorder %s24, 0
      %p93 = por %p91, %p92
      %s94 = ssub.s32 %s25, %s37
      %p95 = scmp.eq.s32.totalorder %s94, 0
      %s97 = sadd.s32 %s96, 1
      %s98 = scalar_select %p95, %s96, %s97
      %p101 = pneg %p95
      %p102 = scmp.eq.s32.totalorder %s18, 3
      %p103 = por %p101, %p102
      %p104 = scmp.ne.s32.totalorder %s96, %s99
      %p105 = scmp.eq.s32.totalorder %s18, 0
      %p106 = por %p104, %p105
      %p107 = scmp.ne.s32.totalorder %s96, %s99
      %p108 = scmp.eq.s32.totalorder %s23, 3
      %p109 = por %p107, %p108
      %p110 = scmp.ne.s32.totalorder %s99, %s100
      %p111 = scmp.eq.s32.totalorder %s23, 0
      %p112 = por %p110, %p111
      %p113 = scmp.ne.s32.totalorder %s99, %s100
      %p114 = scmp.eq.s32.totalorder %s24, 3
      %p115 = por %p113, %p114
      %p117 = scmp.ne.s32.totalorder %s100, %s116
      %p118 = scmp.eq.s32.totalorder %s24, 0
      %p119 = por %p117, %p118
      %p120 = scmp.le.s32.totalorder 1, %s18
      %p121 = scmp.lt.s32.totalorder %s18, 5
      %p122 = pnand %p120, %p121
      %p123 = pneg %p122
      // Predicated region
      $region9: #{tpu_custom_call.1} parent=5 // pred_check
        _
      $region10: #{tpu_custom_call.1} parent=5 // pred_check_branch
        %125 = sbr.rel (%p122) target = $region12
      $region11: #{tpu_custom_call.1} parent=5 // pred_region
        %s126 = ssub.s32 %s18, 1
      $region12: #{tpu_custom_call.1} parent=5 // pred_fallthru
        _
      %p127 = scmp.lt.s32.totalorder %s18, 4
      // Predicated region
      $region13: #{tpu_custom_call.1} parent=5 // pred_check
        %p128 = pneg %p127
      $region14: #{tpu_custom_call.1} parent=5 // pred_check_branch
        %130 = sbr.rel (%p128) target = $region16
      $region15: #{tpu_custom_call.1} parent=5 // pred_region
        // Predicated region
        $region17: #{tpu_custom_call.1} parent=15 // pred_check
          %p131 = pneg %p52
        $region18: #{tpu_custom_call.1} parent=15 // pred_check_branch
          %133 = sbr.rel (%p131) target = $region20
        $region19: #{tpu_custom_call.1} parent=15 // pred_region
          %s134 = sand.u32 %s42, 1
          %s135 = scalar_lea.sflag [#allocation6], %s134
          %s136 = sand.u32 %s42, 1
          %s137 = smul.addr %s136, 4
          %s138 = scalar_lea.vmem [#allocation5], %s137
          %s140 = ssub.s32 64, 64
          %141 = vsyncadd %s135, %s140
          %s142 = smul.addr %s25, 2
          %s143 = sadd.s32 %s26, %s142
          %s144 = smul.addr %s143, 64
          %s145 = scalar_lea.hbm %s1, %s144
          %s147 = sshll.u32 %s138, 4
          %s148 = int_to_ptr.vmem [resolvable:$true] %s147
          %150 = dma.hbm_to_vmem [thread:$0]  %s145, 64, %s148, %s135
        $region20: #{tpu_custom_call.1} parent=15 // pred_fallthru
          _
        // Predicated region
        $region21: #{tpu_custom_call.1} parent=15 // pred_check
          %p151 = pneg %p80
        $region22: #{tpu_custom_call.1} parent=15 // pred_check_branch
          %153 = sbr.rel (%p151) target = $region24
        $region23: #{tpu_custom_call.1} parent=15 // pred_region
          %p154 = scmp.lt.s32.totalorder %s25, 1
          %s155 = scalar_select %p154, %s25, 1
          %p156 = scmp.lt.s32.totalorder %s26, 1
          %s157 = scalar_select %p156, %s26, 1
          %s158 = smul.addr %s155, 2
          %s159 = sadd.s32 %s157, %s158
          %s160 = scalar_lea.vmem %s2, %s159
        $region24: #{tpu_custom_call.1} parent=15 // pred_fallthru
          _
      $region16: #{tpu_custom_call.1} parent=5 // pred_fallthru
        _
      %p161 = scmp.le.s32.totalorder 1, %s18
      %p162 = scmp.lt.s32.totalorder %s18, 5
      %p163 = pnand %p161, %p162
      %p164 = pneg %p163
      // Predicated region
      $region25: #{tpu_custom_call.1} parent=5 // pred_check
        _
      $region26: #{tpu_custom_call.1} parent=5 // pred_check_branch
        %166 = sbr.rel (%p163) target = $region28
      $region27: #{tpu_custom_call.1} parent=5 // pred_region
        %s167 = ssub.s32 %s18, 1
        %s168 = sand.u32 %s45, 1
        %s169 = scalar_lea.sflag [#allocation6], %s168
        %s170 = sand.u32 %s45, 1
        %s171 = smul.addr %s170, 4
        %s172 = scalar_lea.vmem [#allocation5], %s171
        // Predicated region
        $region29: #{tpu_custom_call.1} parent=27 // pred_check
          %p173 = pneg %p58
        $region30: #{tpu_custom_call.1} parent=27 // pred_check_branch
          %175 = sbr.rel (%p173) target = $region32
        $region31: #{tpu_custom_call.1} parent=27 // pred_region
          %176 = dma.done %s169, 64
        $region32: #{tpu_custom_call.1} parent=27 // pred_fallthru
          _
        %s177 = sand.u32 %s45, 1
        %s178 = scalar_lea.sflag [#allocation6], %s177
        %s179 = sand.u32 %s45, 1
        %s180 = smul.addr %s179, 4
        %s181 = scalar_lea.vmem [#allocation5], %s180
        %p182 = pneg %p58
        %p183 = pneg %p55
        %p184 = scmp.lt.s32.totalorder %s27, 1
        %s185 = scalar_select %p184, %s27, 1
        %p186 = scmp.lt.s32.totalorder %s28, 1
        %s187 = scalar_select %p186, %s28, 1
        %s188 = smul.addr %s185, 2
        %s189 = sadd.s32 %s187, %s188
        %s190 = scalar_lea.vmem %s2, %s189
        %p191 = pneg %p86
        %p192 = pneg %p83
        %p193 = pneg %p112
        %p194 = pneg %p109
        %p195 = scmp.lt.s32.totalorder %s27, 1
        %s196 = scalar_select %p195, %s27, 1
        %s197 = smul.addr %s196, 4
        %s198 = scalar_lea.vmem %s3, %s197
        %p199 = scmp.lt.s32.totalorder %s27, 1
        %s200 = scalar_select %p199, %s27, 1
        %p201 = scmp.lt.s32.totalorder %s28, 1
        %s202 = scalar_select %p201, %s28, 1
        %s203 = smul.addr %s200, 2
        %s204 = sadd.s32 %s202, %s203
        %s205 = scalar_lea.vmem %s2, %s204
        %p206 = scmp.lt.s32.totalorder %s27, 1
        %s207 = scalar_select %p206, %s27, 1
        %s208 = smul.addr %s207, 4
        %s209 = scalar_lea.vmem %s3, %s208
        %p210 = scmp.eq.s32.totalorder %s28, 0
        // Predicated region
        $region33: #{tpu_custom_call.1} parent=27 // pred_check
          %p211 = pneg %p210
        $region34: #{tpu_custom_call.1} parent=27 // pred_check_branch
          %213 = sbr.rel (%p211) target = $region36
        $region35: #{tpu_custom_call.1} parent=27 // pred_region
          %vm214 = vcmask 19456
          %215 = vst.msk [vmem:[#allocation2] sm:$0xf] %vm214, -inf
        $region36: #{tpu_custom_call.1} parent=27 // pred_fallthru
          _
        %v216 = vld [vmem:[%s172] sm:$0xf]
        %v217 = vld [vmem:[%s205] sm:$0x1]
        %v218 = vunpack.c.l.b16 %v217
        %s219 = sld [smem:[#allocation4]]
        %v220 = vstv %s219
        %vm221 = vcmp.eq.s32.totalorder %v218, %v220
        %v222 = vsel %vm221, 1, 0
        %v223 = vlaneseq
        %v224 = vshrl.u32 %v223, 7
        %v225 = vsub.s32 0, %v224
        %v226 = vrot.slane %v222, %v225
        %vm227 = vcmp.eq.s32.totalorder %v226, 1
        %v228 = vsel %vm227, %v216, -inf
        %vm229 = vcmask 1043456
        %v230 = vsel %vm229, %v228, -inf
        %231 = vmax.xlane.f32.xlu0 %v230
        %v232 = vpop.xlane.xlu0 %231
        %s233 = sld [smem:[#allocation4 + $0x1]]
        %v234 = vstv %s233
        %vm235 = vcmp.eq.s32.totalorder %v218, %v234
        %v236 = vsel %vm235, 1, 0
        %v237 = vlaneseq
        %v238 = vshrl.u32 %v237, 7
        %v239 = vsub.s32 0, %v238
        %v240 = vrot.slane %v236, %v239
        %vm241 = vcmp.eq.s32.totalorder %v240, 1
        %v242 = vsel %vm241, %v216, -inf
        %v243 = vsel %vm229, %v242, -inf
        %244 = vmax.xlane.f32.xlu0 %v243
        %v245 = vpop.xlane.xlu0 %244
        %s246 = sld [smem:[#allocation4 + $0x2]]
        %v247 = vstv %s246
        %vm248 = vcmp.eq.s32.totalorder %v218, %v247
        %v249 = vsel %vm248, 1, 0
        %v250 = vlaneseq
        %v251 = vshrl.u32 %v250, 7
        %v252 = vsub.s32 0, %v251
        %v253 = vrot.slane %v249, %v252
        %vm254 = vcmp.eq.s32.totalorder %v253, 1
        %v255 = vsel %vm254, %v216, -inf
        %v256 = vsel %vm229, %v255, -inf
        %257 = vmax.xlane.f32.xlu0 %v256
        %v258 = vpop.xlane.xlu0 %257
        %vm259 = vcmask 7168
        %v260 = vsel %vm259, %v232, %v245
        %vm261 = vcmask 15360
        %v262 = vsel %vm261, %v260, %v258
        %v263 = vld [vmem:[#allocation2] sm:$0xf]
        %v264 = vmax.f32 %v263, %v262
        %vm265 = vcmask 19456
        %266 = vst.msk [vmem:[#allocation2] sm:$0xf] %vm265, %v264
        %p267 = scmp.eq.s32.totalorder %s28, 1
        // Predicated region
        $region37: #{tpu_custom_call.1} parent=27 // pred_check
          %p268 = pneg %p267
        $region38: #{tpu_custom_call.1} parent=27 // pred_check_branch
          %270 = sbr.rel (%p268) target = $region40
        $region39: #{tpu_custom_call.1} parent=27 // pred_region
          %v271 = vld [vmem:[#allocation2] sm:$0xf]
          %272 = vst.msk [vmem:[%s209] sm:$0xf] %vm265, %v271
        $region40: #{tpu_custom_call.1} parent=27 // pred_fallthru
          _
        %p273 = scmp.lt.s32.totalorder %s27, 1
        %s274 = scalar_select %p273, %s27, 1
        %s275 = smul.addr %s274, 4
        %s276 = scalar_lea.vmem %s3, %s275
        // Predicated region
        $region41: #{tpu_custom_call.1} parent=27 // pred_check
          %p277 = pneg %p109
        $region42: #{tpu_custom_call.1} parent=27 // pred_check_branch
          %279 = sbr.rel (%p277) target = $region44
        $region43: #{tpu_custom_call.1} parent=27 // pred_region
          _
        $region44: #{tpu_custom_call.1} parent=27 // pred_fallthru
          _
      $region28: #{tpu_custom_call.1} parent=5 // pred_fallthru
        _
      %p280 = scmp.le.s32.totalorder 2, %s18
      // Predicated region
      $region45: #{tpu_custom_call.1} parent=5 // pred_check
        %p281 = pneg %p280
      $region46: #{tpu_custom_call.1} parent=5 // pred_check_branch
        %283 = sbr.rel (%p281) target = $region48
      $region47: #{tpu_custom_call.1} parent=5 // pred_region
        %s284 = ssub.s32 %s18, 2
        // Predicated region
        $region49: #{tpu_custom_call.1} parent=47 // pred_check
          %p285 = pneg %p115
        $region50: #{tpu_custom_call.1} parent=47 // pred_check_branch
          %287 = sbr.rel (%p285) target = $region52
        $region51: #{tpu_custom_call.1} parent=47 // pred_region
          %p288 = scmp.lt.s32.totalorder %s29, 1
          %s289 = scalar_select %p288, %s29, 1
          %s290 = smul.addr %s289, 4
          %s291 = scalar_lea.vmem %s3, %s290
        $region52: #{tpu_custom_call.1} parent=47 // pred_fallthru
          _
      $region48: #{tpu_custom_call.1} parent=5 // pred_fallthru
        _
    $region6: #{tpu_custom_call.1} parent=1 // loop_footer
      %s22 = sadd.s32 1, %s18
    $region7: #{tpu_custom_call.1} parent=1 // loop_footer_branch
      %17 = sbr.rel target = $region3
    $region8: #{tpu_custom_call.1} parent=1 // loop_exit
      _
    %292 = vsyncpa [#allocation6], 1
    %s293 = scalar_lea.sflag [#allocation6], 1
    %294 = vsyncpa %s293, 1

</llo_original>
